<compile_context>
chip_gen: v7x
topology: tpu7x:2x2x1
jax: 0.10.0
libtpu: 0.0.40
codegen_flags: <defaults>
</compile_context>

<pallas_src>
import functools

import numpy as np
import jax
import jax.numpy as jnp
from jax.experimental import pallas as pl
from jax.experimental.pallas import tpu as pltpu

HIDDEN = 64
LANES = 128
# Finite "-inf" for masking (same trick as the TPU flash-attention kernels):
# exp(mask - m) underflows cleanly to 0, no -inf/NaN propagation through max/exp.
_MASK_VALUE = -0.7 * float(np.finfo(np.float32).max)

# VMEM cost per batch row per grid step: double-buffered x block (lane-padded to 128)
# plus double-buffered out block, both f32  ->  2 * 2 * 128 * 4 B = 2 KiB / row.
_BYTES_PER_BATCH_ROW = 2 * 2 * LANES * 4
# 8 MiB tile budget -> tile cap 4096; fits every generation's default scoped VMEM
# (v5e 16 MiB, v6e/v7x 32 MiB), so no explicit vmem_limit_bytes is needed.
_VMEM_TILE_BUDGET_BYTES = 8 * 1024 * 1024

SMALL_BATCH_THRESHOLD = 256   # below this, plain XLA beats kernel launch overhead


def _round_up(n, m):
    return ((n + m - 1) // m) * m


# --------------------------------------------------------------------------- kernel
def _ultimatum_kernel(x_ref, w1_ref, wh_ref, b_ref, out_ref, *, num_actions):
    """relu(x@W1+b1) -> fused policy|value head matmul -> masked softmax -> 128-lane store."""
    x = x_ref[...]                                                # [TB, D_in] f32
    b1 = b_ref[0:1, :]                                            # [1, 128]
    bh = b_ref[1:2, :]                                            # [1, 128]

    # shared layer (cols >= 64 of w1p/b1 are zero -> those h columns are exactly 0)
    h = jnp.dot(x, w1_ref[...], preferred_element_type=jnp.float32) + b1
    h = jnp.maximum(h, 0.0)                                       # [TB, 128]
    # TODO(synk): optional bf16 cast of x/w1p/whp (v5e MXU headroom, halves x DMA);
    # keep preferred_element_type=f32 so accumulation stays f32.

    # fused policy+value head: one matmul, one 128-lane result
    heads = jnp.dot(h, wh_ref[...], preferred_element_type=jnp.float32) + bh

    col = jax.lax.broadcasted_iota(jnp.int32, heads.shape, 1)     # [TB, 128]
    is_policy = col < num_actions

    # softmax over the real policy columns only (value / padding columns masked out)
    logits = jnp.where(is_policy, heads, _MASK_VALUE)
    m = jnp.max(logits, axis=-1, keepdims=True)
    e = jnp.where(is_policy, jnp.exp(logits - m), 0.0)
    policy = e / jnp.sum(e, axis=-1, keepdims=True)               # exact normalization

    # single lane-dense store: policy in cols [0, A), raw value in col A, zeros after
    out = jnp.where(is_policy, policy,
                    jnp.where(col == num_actions, heads, 0.0))
    out_ref[...] = out.astype(out_ref.dtype)


# --------------------------------------------------------------------------- wrapper
def _pick_tile(batch, tile_b):
    """Batch tile: multiple of 8, VMEM-budget capped, >= 2 grid steps when batch >= 16."""
    bp = _round_up(max(batch, 1), 8)
    vmem_cap = max(8, (_VMEM_TILE_BUDGET_BYTES // _BYTES_PER_BATCH_ROW) // 8 * 8)  # 4096
    tile = min(_round_up(tile_b, 8), vmem_cap, bp)
    if bp >= 16:
        # Guarantee >= 2 grid steps so ("parallel",) shards the batch over v7x's two
        # TensorCores; costs at most one extra ~0.35us step on single-TC chips.
        tile = min(tile, _round_up(pl.cdiv(bp, 2), 8))
    return max(8, tile)


@functools.partial(jax.jit, static_argnames=("num_actions", "tile_b", "out_dtype"))
def _fused_forward(x, w1p, whp, biases, *, num_actions, tile_b=4096,
                   out_dtype=jnp.float32):
    batch, d_in = x.shape
    tile = _pick_tile(batch, tile_b)
    # No jnp.pad of x: Pallas handles the partial last block (tail rows are garbage,
    # row-local, and their output writes are dropped).
    grid = (pl.cdiv(batch, tile),)

    out = pl.pallas_call(
        functools.partial(_ultimatum_kernel, num_actions=num_actions),
        out_shape=jax.ShapeDtypeStruct((batch, LANES), out_dtype),
        grid_spec=pltpu.PrefetchScalarGridSpec(
            num_scalar_prefetch=0,
            grid=grid,
            in_specs=[
                pl.BlockSpec((tile, d_in), lambda i: (i, 0)),     # x: streamed
                pl.BlockSpec((d_in, LANES), lambda i: (0, 0)),    # w1p: VMEM-resident
                pl.BlockSpec((LANES, LANES), lambda i: (0, 0)),   # whp: VMEM-resident
                pl.BlockSpec((2, LANES), lambda i: (0, 0)),       # biases: VMEM-resident
            ],
            out_specs=pl.BlockSpec((tile, LANES), lambda i: (i, 0)),
        ),
        compiler_params=pltpu.CompilerParams(
            dimension_semantics=("parallel",)),   # shards batch across v7x's 2 TCs
    )(x, w1p, whp, biases)

    # One contiguous slice of the slab, split in-jit -> XLA fuses it with the kernel
    # output copy instead of re-reading the whole [B,128] slab twice from HBM.
    head = out[:, :num_actions + 1]
    return head[:, :num_actions], head[:, num_actions:num_actions + 1]


@functools.partial(jax.jit, static_argnames=("num_actions",))
def _xla_forward(x, w1p, whp, biases, *, num_actions):
    """Plain XLA path for tiny batches (kernel launch overhead dominates there)."""
    h = jnp.maximum(x @ w1p + biases[0:1], 0.0)
    heads = h @ whp + biases[1:2]
    policy = jax.nn.softmax(heads[:, :num_actions], axis=-1)
    value = heads[:, num_actions:num_actions + 1]
    return policy, value


def ultimatum_forward(packed, x, is_proposer, *, tile_b=4096,
                      out_dtype=jnp.float32, force_pallas=False):
    """Mirrors UltimatumNetwork.forward; `is_proposer` is a static Python bool.

    out_dtype=jnp.bfloat16 is the throughput mode (halves the dominant HBM writeback);
    it loosens value precision -- keep f32 when tight value accuracy is required.
    """
    whp, biases, num_actions = packed["proposer"] if is_proposer else packed["responder"]
    if x.shape[0] < SMALL_BATCH_THRESHOLD and not force_pallas:
        return _xla_forward(x, packed["w1p"], whp, biases, num_actions=num_actions)
    return _fused_forward(x, packed["w1p"], whp, biases, num_actions=num_actions,
                          tile_b=tile_b, out_dtype=out_dtype)


# --------------------------------------------------------------------------- params
def init_params(key, input_size, proposer_actions, responder_actions):
    """PyTorch-style uniform(-1/sqrt(fan_in), 1/sqrt(fan_in)) init (raw layout)."""
    ks = jax.random.split(key, 8)

    def lin(kw, kb, fan_in, fan_out):
        bound = 1.0 / float(np.sqrt(fan_in))
        w = jax.random.uniform(kw, (fan_in, fan_out), jnp.float32, -bound, bound)
        b = jax.random.uniform(kb, (1, fan_out), jnp.float32, -bound, bound)
        return w, b

    w1, b1 = lin(ks[0], ks[1], input_size, HIDDEN)
    wp, bp = lin(ks[2], ks[3], HIDDEN, proposer_actions)
    wr, br = lin(ks[4], ks[5], HIDDEN, responder_actions)
    wv, bv = lin(ks[6], ks[7], HIDDEN, 1)
    return dict(w1=w1, b1=b1, wp=wp, bp=bp, wr=wr, br=br, wv=wv, bv=bv)


def pack_params(raw, input_size):
    """Pack raw params into lane-dense kernel operands (one head-slab per head)."""
    w1p = jnp.zeros((input_size, LANES), jnp.float32).at[:, :HIDDEN].set(raw["w1"])

    def pack_head(wh, bh):
        a = wh.shape[1]
        whp = (jnp.zeros((LANES, LANES), jnp.float32)
               .at[:HIDDEN, :a].set(wh)
               .at[:HIDDEN, a].set(raw["wv"][:, 0]))          # value column fused in
        biases = (jnp.zeros((2, LANES), jnp.float32)
                  .at[0, :HIDDEN].set(raw["b1"][0])
                  .at[1, :a].set(bh[0])
                  .at[1, a].set(raw["bv"][0, 0]))
        return whp, biases, a

    return dict(
        w1p=w1p,
        proposer=pack_head(raw["wp"], raw["bp"]),
        responder=pack_head(raw["wr"], raw["br"]),
    )


# --------------------------------------------------------------------------- reference
def reference_forward(raw, x, is_proposer):
    """float64 numpy reference (independent of XLA/TPU matmul precision modes)."""
    f64 = lambda a: np.asarray(a, dtype=np.float64)
    h = np.maximum(f64(x) @ f64(raw["w1"]) + f64(raw["b1"]), 0.0)
    w, b = (raw["wp"], raw["bp"]) if is_proposer else (raw["wr"], raw["br"])
    logits = h @ f64(w) + f64(b)
    logits = logits - logits.max(axis=-1, keepdims=True)
    e = np.exp(logits)
    policy = e / e.sum(axis=-1, keepdims=True)
    value = h @ f64(raw["wv"]) + f64(raw["bv"])
    return policy, value


# --------------------------------------------------------------------------- test
if __name__ == "__main__":
    key = jax.random.PRNGKey(0)
    k_param, k_x1, k_x2 = jax.random.split(key, 3)

    input_size = 16          # flattened game-state features
    proposer_actions = 11    # offer 0..10
    responder_actions = 2    # accept / reject

    raw = init_params(k_param, input_size, proposer_actions, responder_actions)
    packed = pack_params(raw, input_size)

    ok = True
    # f32 kernel vs float64 numpy reference.  5e-3 tolerance is safe for any TPU
    # f32-matmul lowering while still catching any structural bug (wrong packing,
    # wrong softmax mask, wrong column), which would be O(0.1) off.
    cases = (
        (4, k_x1),     # tiny batch, single partial tile (original use case)
        (300, k_x2),   # multi-step grid, partial last block, 2 parallel steps
    )
    for batch, kx in cases:
        x = jax.random.normal(kx, (batch, input_size), jnp.float32)
        for is_proposer in (True, False):
            policy, value = ultimatum_forward(packed, x, is_proposer, force_pallas=True)
            jax.block_until_ready(policy)
            jax.block_until_ready(value)
            ref_policy, ref_value = reference_forward(raw, np.asarray(x), is_proposer)
            ok &= policy.shape == ref_policy.shape and value.shape == ref_value.shape
            ok &= bool(np.allclose(np.asarray(policy), ref_policy, atol=5e-3, rtol=5e-3))
            ok &= bool(np.allclose(np.asarray(value), ref_value, atol=5e-3, rtol=5e-3))
            ok &= bool(np.allclose(np.asarray(policy).sum(-1), 1.0, atol=1e-3))

    # Small-batch dispatch (plain XLA) must agree with the kernel path.
    x_small = jax.random.normal(k_x1, (4, input_size), jnp.float32)
    p_xla, v_xla = ultimatum_forward(packed, x_small, True)                 # XLA path
    p_pl, v_pl = ultimatum_forward(packed, x_small, True, force_pallas=True)
    ok &= bool(np.allclose(np.asarray(p_xla), np.asarray(p_pl), atol=5e-3))
    ok &= bool(np.allclose(np.asarray(v_xla), np.asarray(v_pl), atol=5e-3))

    # Throughput-mode smoke test: bf16 output slab (halves dominant HBM writeback).
    x_big = jax.random.normal(k_x2, (1024, input_size), jnp.float32)
    p_bf, v_bf = ultimatum_forward(packed, x_big, False, out_dtype=jnp.bfloat16)
    jax.block_until_ready(p_bf)
    ok &= p_bf.shape == (1024, responder_actions) and v_bf.shape == (1024, 1)
    ok &= bool(np.allclose(np.asarray(p_bf, dtype=np.float32).sum(-1), 1.0, atol=5e-2))

    print("KERNEL_OK" if ok else "KERNEL_MISMATCH")
</pallas_src>

<mosaic_0001>
module attributes {stable_mosaic.version = 11 : i64} {
  func.func @_ultimatum_kernel(%arg0: i32, %arg1: memref<8x16xf32, #tpu.memory_space<vmem>>, %arg2: memref<16x128xf32, #tpu.memory_space<vmem>>, %arg3: memref<128x128xf32, #tpu.memory_space<vmem>>, %arg4: memref<2x128xf32, #tpu.memory_space<vmem>>, %arg5: memref<8x128xf32, #tpu.memory_space<vmem>>) attributes {dimension_semantics = [#tpu.dimension_semantics<parallel>], iteration_bounds = array<i64: 1>, scalar_prefetch = 0 : i64, scratch_operands = 0 : i64, tpu.core_type = #tpu.core_type<tc>, window_params = [{transform_indices = @transform_0, window_bounds = array<i64: 8, 16>}, {pipeline_mode = #tpu.pipeline_mode<synchronous>, transform_indices = @transform_1, window_bounds = array<i64: 16, 128>}, {pipeline_mode = #tpu.pipeline_mode<synchronous>, transform_indices = @transform_2, window_bounds = array<i64: 128, 128>}, {pipeline_mode = #tpu.pipeline_mode<synchronous>, transform_indices = @transform_3, window_bounds = array<i64: 2, 128>}, {transform_indices = @transform_4, window_bounds = array<i64: 8, 128>}]} {
    %c0 = arith.constant 0 : index
    %c0_0 = arith.constant 0 : index
    %0 = vector.load %arg1[%c0, %c0_0] : memref<8x16xf32, #tpu.memory_space<vmem>>, vector<8x16xf32>
    %c0_1 = arith.constant 0 : index
    %c0_2 = arith.constant 0 : index
    %1 = vector.load %arg4[%c0_1, %c0_2] : memref<2x128xf32, #tpu.memory_space<vmem>>, vector<1x128xf32>
    %c1 = arith.constant 1 : index
    %c0_3 = arith.constant 0 : index
    %2 = vector.load %arg4[%c1, %c0_3] : memref<2x128xf32, #tpu.memory_space<vmem>>, vector<1x128xf32>
    %c0_4 = arith.constant 0 : index
    %c0_5 = arith.constant 0 : index
    %3 = vector.load %arg2[%c0_4, %c0_5] : memref<16x128xf32, #tpu.memory_space<vmem>>, vector<16x128xf32>
    %cst = arith.constant dense<0.000000e+00> : vector<8x128xf32>
    %4 = tpu.matmul %0, %3, %cst {dimension_numbers = #tpu.dot_dimension_numbers<[1], [0], [0], [1], [0, 0, 1, 1], [], []>} : vector<8x16xf32>, vector<16x128xf32>, vector<8x128xf32> -> vector<8x128xf32>
    %5 = vector.broadcast %1 : vector<1x128xf32> to vector<8x128xf32>
    %6 = arith.addf %4, %5 : vector<8x128xf32>
    %cst_6 = arith.constant 0.000000e+00 : f32
    %7 = vector.broadcast %cst_6 : f32 to vector<8x128xf32>
    %8 = arith.maximumf %6, %7 : vector<8x128xf32>
    %c0_7 = arith.constant 0 : index
    %c0_8 = arith.constant 0 : index
    %9 = vector.load %arg3[%c0_7, %c0_8] : memref<128x128xf32, #tpu.memory_space<vmem>>, vector<128x128xf32>
    %cst_9 = arith.constant dense<0.000000e+00> : vector<8x128xf32>
    %10 = tpu.matmul %8, %9, %cst_9 {dimension_numbers = #tpu.dot_dimension_numbers<[1], [0], [0], [1], [0, 0, 1, 1], [], []>} : vector<8x128xf32>, vector<128x128xf32>, vector<8x128xf32> -> vector<8x128xf32>
    %11 = vector.broadcast %2 : vector<1x128xf32> to vector<8x128xf32>
    %12 = arith.addf %10, %11 : vector<8x128xf32>
    %13 = tpu.iota {dimensions = array<i32: 1>} : vector<8x128xi32>
    %c11_i32 = arith.constant 11 : i32
    %14 = vector.broadcast %c11_i32 : i32 to vector<8x128xi32>
    %15 = arith.cmpi slt, %13, %14 : vector<8x128xi32>
    %cst_10 = arith.constant -2.38197633E+38 : f32
    %16 = vector.broadcast %cst_10 : f32 to vector<8x128xf32>
    %17 = arith.select %15, %12, %16 : vector<8x128xi1>, vector<8x128xf32>
    %cst_11 = arith.constant dense<0xFF800000> : vector<8xf32>
    %18 = vector.multi_reduction <maximumf>, %17, %cst_11 [1] : vector<8x128xf32> to vector<8xf32>
    %19 = vector.shape_cast %18 : vector<8xf32> to vector<8x1xf32>
    %20 = vector.broadcast %19 : vector<8x1xf32> to vector<8x128xf32>
    %21 = arith.subf %17, %20 : vector<8x128xf32>
    %22 = math.exp %21 : vector<8x128xf32>
    %cst_12 = arith.constant 0.000000e+00 : f32
    %23 = vector.broadcast %cst_12 : f32 to vector<8x128xf32>
    %24 = arith.select %15, %22, %23 : vector<8x128xi1>, vector<8x128xf32>
    %cst_13 = arith.constant dense<0.000000e+00> : vector<8xf32>
    %25 = vector.multi_reduction <add>, %24, %cst_13 [1] : vector<8x128xf32> to vector<8xf32>
    %26 = vector.shape_cast %25 : vector<8xf32> to vector<8x1xf32>
    %27 = vector.broadcast %26 : vector<8x1xf32> to vector<8x128xf32>
    %28 = arith.divf %24, %27 : vector<8x128xf32>
    %c11_i32_14 = arith.constant 11 : i32
    %29 = vector.broadcast %c11_i32_14 : i32 to vector<8x128xi32>
    %30 = arith.cmpi eq, %13, %29 : vector<8x128xi32>
    %cst_15 = arith.constant 0.000000e+00 : f32
    %31 = vector.broadcast %cst_15 : f32 to vector<8x128xf32>
    %32 = arith.select %30, %12, %31 : vector<8x128xi1>, vector<8x128xf32>
    %33 = arith.select %15, %28, %32 : vector<8x128xi1>, vector<8x128xf32>
    %c0_16 = arith.constant 0 : index
    %c0_17 = arith.constant 0 : index
    %34 = vector.load %arg5[%c0_16, %c0_17] : memref<8x128xf32, #tpu.memory_space<vmem>>, vector<8x128xf32>
    tpu.vector_store %arg5[%c0_16, %c0_17], %33 {strides = array<i32>} : memref<8x128xf32, #tpu.memory_space<vmem>>, vector<8x128xf32>,
    return
  }
  func.func @transform_0(%arg0: i32) -> (i32, i32) {
    %c0_i32 = arith.constant 0 : i32
    %c0_i32_0 = arith.constant 0 : i32
    return %arg0, %c0_i32 : i32, i32
  }
  func.func @transform_1(%arg0: i32) -> (i32, i32) {
    %c0_i32 = arith.constant 0 : i32
    %c0_i32_0 = arith.constant 0 : i32
    %c0_i32_1 = arith.constant 0 : i32
    return %c0_i32, %c0_i32_0 : i32, i32
  }
  func.func @transform_2(%arg0: i32) -> (i32, i32) {
    %c0_i32 = arith.constant 0 : i32
    %c0_i32_0 = arith.constant 0 : i32
    %c0_i32_1 = arith.constant 0 : i32
    return %c0_i32, %c0_i32_0 : i32, i32
  }
  func.func @transform_3(%arg0: i32) -> (i32, i32) {
    %c0_i32 = arith.constant 0 : i32
    %c0_i32_0 = arith.constant 0 : i32
    %c0_i32_1 = arith.constant 0 : i32
    return %c0_i32, %c0_i32_0 : i32, i32
  }
  func.func @transform_4(%arg0: i32) -> (i32, i32) {
    %c0_i32 = arith.constant 0 : i32
    %c0_i32_0 = arith.constant 0 : i32
    return %arg0, %c0_i32 : i32, i32
  }
}

</mosaic_0001>

<llo_original>
// kernel: _fused_forward.1
$region0: #{_fused_forward.1}
  #allocation0 [shape = 'u32[]', space=smem, size = 0x4, offset = 0x4, fixed_abs, tag = 'smem constant byte address 0x4 - core index']
  #allocation1 [shape = 'u32[144,128]{1,0:T(1,128)}', space=vmem, size = 0x12000, scoped, tag = 'internal scratch']
  %s0 = inlined_call_operand.hbm [shape: f32[4,16], index: 0, kind: input, shape index: {}]
  %s1 = inlined_call_operand.hbm [shape: f32[16,128], index: 1, kind: input, shape index: {}]
  %s2 = inlined_call_operand.hbm [shape: f32[128,128], index: 2, kind: input, shape index: {}]
  %s3 = inlined_call_operand.vmem [shape: f32[2,128], index: 3, kind: input, shape index: {}]
  %s4 = inlined_call_operand.vmem [shape: f32[4,128], index: 4, kind: output, shape index: {}]
  %s5 = sld [smem:[#allocation0]]
  $region68: #{_fused_forward.1} parent=0
    _
  %s7 = ssub.s32 1, %s5
  %s8 = scalar_select 0, %s7, %s5
  $region1: #{_fused_forward.1} parent=0
    #allocation2 [shape = 'u8[4096]{0}', space=vmem, size = 0x1000, scoped, tag = 'input window, operand 0, single buffered']
    #allocation3 [shape = 's32[1]{0}', space=sflag, size = 0x4, scoped, tag = 'scoped memory for _fused_forward.1']
    #allocation4 [shape = 'u8[8192]{0}', space=vmem, size = 0x2000, scoped, tag = 'input window, operand 1, single buffered']
    #allocation5 [shape = 's32[1]{0}', space=sflag, size = 0x4, scoped, tag = 'scoped memory for _fused_forward.1']
    #allocation6 [shape = 'u8[65536]{0}', space=vmem, size = 0x10000, scoped, tag = 'input window, operand 2, single buffered']
    #allocation7 [shape = 'u8[4096]{0}', space=vmem, size = 0x1000, scoped, tag = 'output window, operand 0, single buffered']
    %9 = vsyncpa [#allocation3], 0
    %10 = vsyncpa [#allocation5], 0
    // Predicated region
    $region2: #{_fused_forward.1} parent=1 // pred_check
      _
    $region3: #{_fused_forward.1} parent=1 // pred_check_branch
      %12 = sbr.rel (0) target = $region5
    $region4: #{_fused_forward.1} parent=1 // pred_region
      %s14 = ssub.s32 128, 64
      %15 = vsyncadd [#allocation3], %s14
      %s16 = sshll.u32 [#allocation2], 4
      %s17 = int_to_ptr.vmem [resolvable:$true] %s16
      %22 = dma.hbm_to_vmem [thread:$0]  %s0, 64, %s17, [#allocation3], 64, 64, 4
    $region5: #{_fused_forward.1} parent=1 // pred_fallthru
      _
    // Predicated region
    $region6: #{_fused_forward.1} parent=1 // pred_check
      _
    $region7: #{_fused_forward.1} parent=1 // pred_check_branch
      %24 = sbr.rel (0) target = $region9
    $region8: #{_fused_forward.1} parent=1 // pred_region
      %s26 = ssub.s32 256, 256
      %27 = vsyncadd [#allocation5], %s26
      %s28 = sshll.u32 [#allocation4], 4
      %s29 = int_to_ptr.vmem [resolvable:$true] %s28
      %34 = dma.hbm_to_vmem [thread:$0]  %s1, 256, %s29, [#allocation5], 128, 128, 8
    $region9: #{_fused_forward.1} parent=1 // pred_fallthru
      _
    // Predicated region
    $region10: #{_fused_forward.1} parent=1 // pred_check
      _
    $region11: #{_fused_forward.1} parent=1 // pred_check_branch
      %36 = sbr.rel (0) target = $region13
    $region12: #{_fused_forward.1} parent=1 // pred_region
      %s38 = ssub.s32 2048, 2048
      %39 = vsyncadd [#allocation5], %s38
      %s40 = sshll.u32 [#allocation6], 4
      %s41 = int_to_ptr.vmem [resolvable:$true] %s40
      %46 = dma.hbm_to_vmem [thread:$0]  %s2, 2048, %s41, [#allocation5], 128, 128, 8
    $region13: #{_fused_forward.1} parent=1 // pred_fallthru
      _
    // Predicated region
    $region14: #{_fused_forward.1} parent=1 // pred_check
      _
    $region15: #{_fused_forward.1} parent=1 // pred_check_branch
      %48 = sbr.rel (0) target = $region17
    $region16: #{_fused_forward.1} parent=1 // pred_region
      _
    $region17: #{_fused_forward.1} parent=1 // pred_fallthru
      _
    // Predicated region
    $region18: #{_fused_forward.1} parent=1 // pred_check
      _
    $region19: #{_fused_forward.1} parent=1 // pred_check_branch
      %50 = sbr.rel (0) target = $region21
    $region20: #{_fused_forward.1} parent=1 // pred_region
      %51 = dma.done [#allocation3], 128
    $region21: #{_fused_forward.1} parent=1 // pred_fallthru
      _
    // Predicated region
    $region22: #{_fused_forward.1} parent=1 // pred_check
      _
    $region23: #{_fused_forward.1} parent=1 // pred_check_branch
      %53 = sbr.rel (0) target = $region25
    $region24: #{_fused_forward.1} parent=1 // pred_region
      %54 = dma.done [#allocation5], 256
    $region25: #{_fused_forward.1} parent=1 // pred_fallthru
      _
    // Predicated region
    $region26: #{_fused_forward.1} parent=1 // pred_check
      _
    $region27: #{_fused_forward.1} parent=1 // pred_check_branch
      %56 = sbr.rel (0) target = $region29
    $region28: #{_fused_forward.1} parent=1 // pred_region
      %57 = dma.done [#allocation5], 2048
    $region29: #{_fused_forward.1} parent=1 // pred_fallthru
      _
    %v58 = vld [vmem:[#allocation2] sm:$0xff]
    %v59 = vld [vmem:[%s3] sm:$0x1]
    %v60 = vld [vmem:[%s3 + $0x1] sm:$0x1]
    %v61 = vld [vmem:[#allocation4] sm:$0xff]
    %v62 = vld [vmem:[#allocation4 + $0x8] sm:$0xff]
    %v63 = vlaneseq
    %v64 = vshrl.u32 %v63, 7
    %v65 = vsub.s32 0, %v64
    %v66 = vrot.slane %v59, %v65
    %vm67 = vcmask 130048
    %v69 = vsel %vm67, %v58, 0
    %71 = vmatprep.subr.mxu0 0.0
    %72 = vmatpush1.msra.mxu0 %v61
    %73 = vmatprep.subr.mxu0 0.0
    %74 = vmatpush1.msra.mxu0 %v62
    %75 = vmatprep.subr.mxu0 0.0
    %76 = vmatpush1.msra.mxu0 0.0
    %77 = vmatprep.subr.mxu0 0.0
    %78 = vmatpush1.msra.mxu0 0.0
    %79 = vmatprep.subr.mxu0 0.0
    %80 = vmatpush1.msra.mxu0 0.0
    %81 = vmatprep.subr.mxu0 0.0
    %82 = vmatpush1.msra.mxu0 0.0
    %83 = vmatprep.subr.mxu0 0.0
    %84 = vmatpush1.msra.mxu0 0.0
    %85 = vmatprep.subr.mxu0 0.0
    %86 = vmatpush1.msra.mxu0 0.0
    %87 = vmatprep.subr.mxu0 0.0
    %88 = vmatpush1.msra.mxu0 0.0
    %89 = vmatprep.subr.mxu0 0.0
    %90 = vmatpush1.msra.mxu0 0.0
    %91 = vmatprep.subr.mxu0 0.0
    %92 = vmatpush1.msra.mxu0 0.0
    %93 = vmatprep.subr.mxu0 0.0
    %94 = vmatpush1.msra.mxu0 0.0
    %95 = vmatprep.subr.mxu0 0.0
    %96 = vmatpush1.msra.mxu0 0.0
    %97 = vmatprep.subr.mxu0 0.0
    %98 = vmatpush1.msra.mxu0 0.0
    %99 = vmatprep.subr.mxu0 0.0
    %100 = vmatpush1.msra.mxu0 0.0
    %101 = vmatprep.subr.mxu0 0.0
    %102 = vmatpush1.msra.mxu0 0.0
    %103 = vmatprep.subr.mxu0 0.0
    %104 = vmatpush1.msra.mxu0 0.0
    %105 = vmatprep.subr.mxu0 0.0
    %106 = vmatpush1.msra.mxu0 0.0
    %107 = vmatprep.subr.mxu0 0.0
    %108 = vmatpush1.msra.mxu0 0.0
    %109 = vmatprep.subr.mxu0 0.0
    %110 = vmatpush1.msra.mxu0 0.0
    %111 = vmatprep.subr.mxu0 0.0
    %112 = vmatpush1.msra.mxu0 0.0
    %113 = vmatprep.subr.mxu0 0.0
    %114 = vmatpush1.msra.mxu0 0.0
    %115 = vmatprep.subr.mxu0 0.0
    %116 = vmatpush1.msra.mxu0 0.0
    %117 = vmatprep.subr.mxu0 0.0
    %118 = vmatpush1.msra.mxu0 0.0
    %119 = vmatprep.subr.mxu0 0.0
    %120 = vmatpush1.msra.mxu0 0.0
    %121 = vmatprep.subr.mxu0 0.0
    %122 = vmatpush1.msra.mxu0 0.0
    %123 = vmatprep.subr.mxu0 0.0
    %124 = vmatpush1.msra.mxu0 0.0
    %125 = vmatprep.subr.mxu0 0.0
    %126 = vmatpush1.msra.mxu0 0.0
    %127 = vmatprep.subr.mxu0 0.0
    %128 = vmatpush1.msra.mxu0 0.0
    %129 = vmatprep.subr.mxu0 0.0
    %130 = vmatpush1.msra.mxu0 0.0
    %131 = vmatprep.subr.mxu0 0.0
    %132 = vmatpush1.msra.mxu0 0.0
    %133 = vmatprep.subr.mxu0 0.0
    %134 = vmatpush1.msra.mxu0 0.0
    %135 = vmatprep.mubr.f32.mxu0 0.0
    %136 = vmatmul.mubr.f32.gmra.mrb[0].mxu0 %v69
    %v137 = vpop.f32.mrb[0].mxu0
    %v138 = vadd.f32 %v66, %v137
    %v139 = vpop.f32.mrb[0].mxu0
    %140 = vdwg.mxu0
    %v141 = vmax.f32 %v138, 0.0
    %v142 = vld [vmem:[#allocation6] sm:$0xff]
    %v143 = vld [vmem:[#allocation6 + $0x8] sm:$0xff]
    %v144 = vld [vmem:[#allocation6 + $0x10] sm:$0xff]
    %v145 = vld [vmem:[#allocation6 + $0x18] sm:$0xff]
    %v146 = vld [vmem:[#allocation6 + $0x20] sm:$0xff]
    %v147 = vld [vmem:[#allocation6 + $0x28] sm:$0xff]
    %v148 = vld [vmem:[#allocation6 + $0x30] sm:$0xff]
    %v149 = vld [vmem:[#allocation6 + $0x38] sm:$0xff]
    %v150 = vld [vmem:[#allocation6 + $0x40] sm:$0xff]
    %v151 = vld [vmem:[#allocation6 + $0x48] sm:$0xff]
    %v152 = vld [vmem:[#allocation6 + $0x50] sm:$0xff]
    %v153 = vld [vmem:[#allocation6 + $0x58] sm:$0xff]
    %v154 = vld [vmem:[#allocation6 + $0x60] sm:$0xff]
    %v155 = vld [vmem:[#allocation6 + $0x68] sm:$0xff]
    %v156 = vld [vmem:[#allocation6 + $0x70] sm:$0xff]
    %v157 = vld [vmem:[#allocation6 + $0x78] sm:$0xff]
    %v158 = vlaneseq
    %v159 = vshrl.u32 %v158, 7
    %v160 = vsub.s32 0, %v159
    %v161 = vrot.slane %v60, %v160
    %162 = vmatprep.subr.mxu0 0.0
    %163 = vmatpush1.msra.mxu0 %v142
    %164 = vmatprep.subr.mxu0 0.0
    %165 = vmatpush1.msra.mxu0 %v143
    %166 = vmatprep.subr.mxu0 0.0
    %167 = vmatpush1.msra.mxu0 %v144
    %168 = vmatprep.subr.mxu0 0.0
    %169 = vmatpush1.msra.mxu0 %v145
    %170 = vmatprep.subr.mxu0 0.0
    %171 = vmatpush1.msra.mxu0 %v146
    %172 = vmatprep.subr.mxu0 0.0
    %173 = vmatpush1.msra.mxu0 %v147
    %174 = vmatprep.subr.mxu0 0.0
    %175 = vmatpush1.msra.mxu0 %v148
    %176 = vmatprep.subr.mxu0 0.0
    %177 = vmatpush1.msra.mxu0 %v149
    %178 = vmatprep.subr.mxu0 0.0
    %179 = vmatpush1.msra.mxu0 %v150
    %180 = vmatprep.subr.mxu0 0.0
    %181 = vmatpush1.msra.mxu0 %v151
    %182 = vmatprep.subr.mxu0 0.0
    %183 = vmatpush1.msra.mxu0 %v152
    %184 = vmatprep.subr.mxu0 0.0
    %185 = vmatpush1.msra.mxu0 %v153
    %186 = vmatprep.subr.mxu0 0.0
    %187 = vmatpush1.msra.mxu0 %v154
    %188 = vmatprep.subr.mxu0 0.0
    %189 = vmatpush1.msra.mxu0 %v155
    %190 = vmatprep.subr.mxu0 0.0
    %191 = vmatpush1.msra.mxu0 %v156
    %192 = vmatprep.subr.mxu0 0.0
    %193 = vmatpush1.msra.mxu0 %v157
    %194 = vmatprep.subr.mxu0 0.0
    %195 = vmatpush1.msra.mxu0 0.0
    %196 = vmatprep.subr.mxu0 0.0
    %197 = vmatpush1.msra.mxu0 0.0
    %198 = vmatprep.subr.mxu0 0.0
    %199 = vmatpush1.msra.mxu0 0.0
    %200 = vmatprep.subr.mxu0 0.0
    %201 = vmatpush1.msra.mxu0 0.0
    %202 = vmatprep.subr.mxu0 0.0
    %203 = vmatpush1.msra.mxu0 0.0
    %204 = vmatprep.subr.mxu0 0.0
    %205 = vmatpush1.msra.mxu0 0.0
    %206 = vmatprep.subr.mxu0 0.0
    %207 = vmatpush1.msra.mxu0 0.0
    %208 = vmatprep.subr.mxu0 0.0
    %209 = vmatpush1.msra.mxu0 0.0
    %210 = vmatprep.subr.mxu0 0.0
    %211 = vmatpush1.msra.mxu0 0.0
    %212 = vmatprep.subr.mxu0 0.0
    %213 = vmatpush1.msra.mxu0 0.0
    %214 = vmatprep.subr.mxu0 0.0
    %215 = vmatpush1.msra.mxu0 0.0
    %216 = vmatprep.subr.mxu0 0.0
    %217 = vmatpush1.msra.mxu0 0.0
    %218 = vmatprep.subr.mxu0 0.0
    %219 = vmatpush1.msra.mxu0 0.0
    %220 = vmatprep.subr.mxu0 0.0
    %221 = vmatpush1.msra.mxu0 0.0
    %222 = vmatprep.subr.mxu0 0.0
    %223 = vmatpush1.msra.mxu0 0.0
    %224 = vmatprep.subr.mxu0 0.0
    %225 = vmatpush1.msra.mxu0 0.0
    %226 = vmatprep.mubr.f32.mxu0 0.0
    %227 = vmatmul.mubr.f32.gmra.mrb[0].mxu0 %v141
    %v228 = vpop.f32.mrb[0].mxu0
    %v229 = vadd.f32 %v161, %v228
    %v230 = vpop.f32.mrb[0].mxu0
    %231 = vdwg.mxu0
    %v232 = vlaneseq
    %v233 = vand.u32 %v232, 127
    %vm234 = vcmp.lt.s32.totalorder %v233, 11
    %v235 = vsel %vm234, %v229, -2.3819763e+38
    %236 = vmax.xlane.f32.xlu0 %v235
    %v237 = vpop.xlane.xlu0 %236
    %v238 = vsub.f32 %v235, %v237
    %v239 = vmul.f32 %v238, 1.442695
    %v240 = vpow.pop %v239
    %v241 = vsel %vm234, %v240, 0.0
    %242 = vadd.xlane.f32.xlu0 %v241
    %v243 = vpop.xlane.xlu0 %242
    %v244 = vrcp.pop %v243
    %v245 = vmul.f32 %v241, %v244
    %vm246 = vcmp.eq.s32.totalorder %v233, 11
    %v247 = vsel %vm246, %v229, 0.0
    %v248 = vsel %vm234, %v245, %v247
    %249 = vst [vmem:[#allocation7] sm:$0xff] %v248
    // Predicated region
    $region30: #{_fused_forward.1} parent=1 // pred_check
      _
    $region31: #{_fused_forward.1} parent=1 // pred_check_branch
      %251 = sbr.rel (0) target = $region33
    $region32: #{_fused_forward.1} parent=1 // pred_region
      // Predicated region
      $region34: #{_fused_forward.1} parent=32 // pred_check
        _
      $region35: #{_fused_forward.1} parent=32 // pred_check_branch
        %253 = sbr.rel (0) target = $region37
      $region36: #{_fused_forward.1} parent=32 // pred_region
        // Predicated region
        $region38: #{_fused_forward.1} parent=36 // pred_check
          _
        $region39: #{_fused_forward.1} parent=36 // pred_check_branch
          %255 = sbr.rel target = $region41
        $region40: #{_fused_forward.1} parent=36 // pred_region
          // Predicated region
          $region53: #{_fused_forward.1} parent=40 // pred_check
            _
          $region54: #{_fused_forward.1} parent=40 // pred_check_branch
            %270 = sbr.rel (0) target = $region56
          $region55: #{_fused_forward.1} parent=40 // pred_region
            loop: start=0, step=1, limit=1
            $region57: #{_fused_forward.1} parent=55 // loop_pre_header
              _
            $region58: #{_fused_forward.1} parent=55 // loop_header
              %s273 = sphi 0, %s277
              %p274 = scmp.ge.s32.totalorder %s273, 1
              %s278 = sphi [#allocation7], [#allocation7]
              %s279 = sphi %s4, %s4
            $region59: #{_fused_forward.1} parent=55 // loop_header_branch
              %276 = sbr.rel (%p274) target = $region63
            $region60: #{_fused_forward.1} parent=55 // loop_body
              %v280 = vld [vmem:[%s278] sm:$0xf]
              %281 = vst [vmem:[%s279] sm:$0xf] %v280
            $region61: #{_fused_forward.1} parent=55 // loop_footer
              %s277 = sadd.s32 1, %s273
            $region62: #{_fused_forward.1} parent=55 // loop_footer_branch
              %272 = sbr.rel target = $region58
            $region63: #{_fused_forward.1} parent=55 // loop_exit
              _
          $region56: #{_fused_forward.1} parent=40 // pred_fallthru
            _
        $region41: #{_fused_forward.1} parent=36 // pred_fallthru
          _
        // Predicated region
        $region42: #{_fused_forward.1} parent=36 // pred_check
          _
        $region43: #{_fused_forward.1} parent=36 // pred_check_branch
          %257 = sbr.rel (0) target = $region45
        $region44: #{_fused_forward.1} parent=36 // pred_region
          loop: start=0, step=1, limit=1
          $region46: #{_fused_forward.1} parent=44 // loop_pre_header
            _
          $region47: #{_fused_forward.1} parent=44 // loop_header
            %s260 = sphi 0, %s264
            %p261 = scmp.ge.s32.totalorder %s260, 1
            %s265 = sphi [#allocation7], [#allocation7]
            %s266 = sphi %s4, %s4
          $region48: #{_fused_forward.1} parent=44 // loop_header_branch
            %263 = sbr.rel (%p261) target = $region52
          $region49: #{_fused_forward.1} parent=44 // loop_body
            %v267 = vld [vmem:[%s265] sm:$0xf]
            %268 = vst [vmem:[%s266] sm:$0xf] %v267
          $region50: #{_fused_forward.1} parent=44 // loop_footer
            %s264 = sadd.s32 1, %s260
          $region51: #{_fused_forward.1} parent=44 // loop_footer_branch
            %259 = sbr.rel target = $region47
          $region52: #{_fused_forward.1} parent=44 // loop_exit
            _
        $region45: #{_fused_forward.1} parent=36 // pred_fallthru
          _
      $region37: #{_fused_forward.1} parent=32 // pred_fallthru
        _
      %282 = vnop
    $region33: #{_fused_forward.1} parent=1 // pred_fallthru
      _
    // Predicated region
    $region64: #{_fused_forward.1} parent=1 // pred_check
      _
    $region65: #{_fused_forward.1} parent=1 // pred_check_branch
      %284 = sbr.rel (0) target = $region67
    $region66: #{_fused_forward.1} parent=1 // pred_region
      _
    $region67: #{_fused_forward.1} parent=1 // pred_fallthru
      _
    %285 = vsyncpa [#allocation3], 1
    %286 = vsyncpa [#allocation5], 1

</llo_original>
